<compile_context>
chip_gen: v5e
topology: v5e:2x2
jax: 0.10.0
libtpu: 0.0.40
codegen_flags: <defaults>
</compile_context>

<pallas_src>
import jax
import jax.numpy as jnp
from jax.experimental import pallas as pl
from jax.experimental.pallas import tpu as pltpu

_MIB = 1024 * 1024


def _dropout2d_kernel(x_ref, m_ref, o_ref):
    # Streaming multiply: (rows, cols) * (rows, 1) broadcast.  Mask is f32;
    # cast back to the output dtype only at the store.
    o_ref[...] = (x_ref[...] * m_ref[...]).astype(o_ref.dtype)


def _sublane(dtype) -> int:
    # Native sublane tile: 8 rows for 32-bit, 16 for bf16/f16, 32 for 8-bit.
    return max(8, 32 // jnp.dtype(dtype).itemsize)


def _vmem_budget():
    """(block_bytes, vmem_limit_bytes), gated on the generation's VMEM size."""
    vmem_cap = 128 * _MIB
    try:
        info = pltpu.get_tpu_info()
        vmem_cap = int(getattr(info, "vmem_capacity_bytes", vmem_cap)) or vmem_cap
    except Exception:
        pass  # fall back to conservative v5e/v6e numbers
    if vmem_cap >= 96 * _MIB:
        # v5e / v6e: 128 MiB physical VMEM -> ~4 MiB blocks, 64 MiB scoped.
        return 4 * _MIB, 64 * _MIB
    # v7x: 64 MiB per TensorCore -> keep double-buffered in+out well under it.
    return 2 * _MIB, 24 * _MIB


def _choose_block(num_rows, num_cols, itemsize, block_bytes, sublane):
    """Pick a lane-dense (rows, cols) block of roughly `block_bytes`."""
    # Columns: take the full row when `sublane` rows of it fit in the budget
    # (fully contiguous HBM DMA, no ragged column tiles); otherwise a multiple
    # of 128 lanes.
    if sublane * num_cols * itemsize <= block_bytes or num_cols <= 128:
        cols = num_cols
    else:
        cols = (block_bytes // (sublane * itemsize)) // 128 * 128
        cols = max(128, min(cols, num_cols))
    rows = block_bytes // (cols * itemsize)
    if rows >= num_rows:
        rows = num_rows                                   # full extent: always legal
    else:
        rows = max(sublane, (rows // sublane) * sublane)  # dtype-aware alignment
        rows = min(rows, num_rows)
    # v7x megacore: if the whole array fits in a single block, the grid
    # collapses to one step on one TensorCore.  Split rows so the "parallel"
    # i axis has extent >= 2 (skipped when sublane alignment forbids it).
    if cols == num_cols and rows == num_rows and num_rows >= 2 * sublane:
        half = (pl.cdiv(num_rows, 2) // sublane) * sublane
        rows = max(sublane, half)
    return rows, cols


def dropout2d(x, p, seed, *, training=True):
    """Forward pass of pygmalion Dropout as a Pallas TPU kernel.

    x: (N, C, H, W).  p: dropout probability or None.  seed: int RNG seed for
    the per-(sample, channel) keep/drop draws.
    """
    # Module-level passthroughs (no compute -> plain JAX glue).
    if p is None or not training or p == 0.0:
        return x
    p = float(p)
    if p < 0.0 or p > 1.0:
        raise ValueError(f"dropout probability has to be between 0 and 1, got {p}")
    if p == 1.0:
        return jnp.zeros_like(x)

    N, C, H, W = x.shape
    R, HW = N * C, H * W
    itemsize = x.dtype.itemsize

    # Hoisted RNG: one vectorized draw for all (n, c) channels, giving a
    # per-channel float32 multiplier of 0.0 (dropped, prob p) or 1/(1-p).
    key = jax.random.PRNGKey(int(seed))
    keep = jax.random.uniform(key, (R, 1), dtype=jnp.float32) >= p
    mult = keep.astype(jnp.float32) * jnp.float32(1.0 / (1.0 - p))

    x2 = x.reshape(R, HW)
    block_bytes, vmem_limit = _vmem_budget()
    sublane = _sublane(x.dtype)
    rows, cols = _choose_block(R, HW, itemsize, block_bytes, sublane)
    grid = (pl.cdiv(R, rows), pl.cdiv(HW, cols))  # j innermost: mask block reused

    cost = pl.CostEstimate(
        flops=R * HW,
        transcendentals=0,
        bytes_accessed=2 * R * HW * itemsize + R * 4,
    )

    out = pl.pallas_call(
        _dropout2d_kernel,
        out_shape=jax.ShapeDtypeStruct((R, HW), x.dtype),
        grid=grid,
        in_specs=[
            pl.BlockSpec((rows, cols), lambda i, j: (i, j)),
            pl.BlockSpec((rows, 1), lambda i, j: (i, 0)),
        ],
        out_specs=pl.BlockSpec((rows, cols), lambda i, j: (i, j)),
        compiler_params=pltpu.CompilerParams(
            dimension_semantics=("parallel", "parallel"),
            vmem_limit_bytes=vmem_limit,
        ),
        cost_estimate=cost,
    )(x2, mult)
    return out.reshape(N, C, H, W)


if __name__ == "__main__":
    key = jax.random.PRNGKey(0)
    N, C, H, W = 2, 4, 16, 16
    x = jax.random.normal(key, (N, C, H, W), dtype=jnp.float32)
    p = 0.5

    # Training-mode channel dropout.
    y = jax.block_until_ready(dropout2d(x, p, seed=123, training=True))

    # p=None path (and eval path) is identity, matching the PyTorch module.
    y_none = jax.block_until_ready(dropout2d(x, None, seed=0, training=True))
    assert jnp.array_equal(y_none, x)
    y_eval = jax.block_until_ready(dropout2d(x, p, seed=0, training=False))
    assert jnp.array_equal(y_eval, x)

    # Verify dropout2d semantics: each (n, c) feature map is either entirely
    # zero (dropped) or exactly x * 1/(1-p) (kept and rescaled).
    scale = 1.0 / (1.0 - p)
    n_dropped = 0
    for n in range(N):
        for c in range(C):
            ch = y[n, c]
            if bool(jnp.all(ch == 0.0)):
                n_dropped += 1
            else:
                assert bool(jnp.allclose(ch, x[n, c] * scale, rtol=1e-6, atol=1e-6)), \
                    f"channel ({n},{c}) not scaled correctly"
    assert 0 <= n_dropped <= N * C

    # bf16 path: exercises the dtype-aware sublane tiling and the f32 mask
    # multiply with a cast only at the store.
    xb = x.astype(jnp.bfloat16)
    yb = jax.block_until_ready(dropout2d(xb, p, seed=7, training=True))
    for n in range(N):
        for c in range(C):
            ch = yb[n, c].astype(jnp.float32)
            if not bool(jnp.all(ch == 0.0)):
                ref = (xb[n, c].astype(jnp.float32) * scale)
                assert bool(jnp.allclose(ch, ref, rtol=2e-2, atol=2e-2)), \
                    f"bf16 channel ({n},{c}) not scaled correctly"

    print("KERNEL_OK")
</pallas_src>

<mosaic_0001>
module attributes {stable_mosaic.version = 11 : i64} {
  func.func @_dropout2d_kernel(%arg0: i32, %arg1: i32, %arg2: memref<8x256xf32, #tpu.memory_space<vmem>>, %arg3: memref<8x1xf32, #tpu.memory_space<vmem>>, %arg4: memref<8x256xf32, #tpu.memory_space<vmem>>) attributes {dimension_semantics = [#tpu.dimension_semantics<parallel>, #tpu.dimension_semantics<parallel>], iteration_bounds = array<i64: 1, 1>, scalar_prefetch = 0 : i64, scratch_operands = 0 : i64, tpu.core_type = #tpu.core_type<tc>, window_params = [{transform_indices = @transform_0, window_bounds = array<i64: 8, 256>}, {transform_indices = @transform_1, window_bounds = array<i64: 8, 1>}, {transform_indices = @transform_2, window_bounds = array<i64: 8, 256>}]} {
    %c0 = arith.constant 0 : index
    %c0_0 = arith.constant 0 : index
    %0 = vector.load %arg2[%c0, %c0_0] : memref<8x256xf32, #tpu.memory_space<vmem>>, vector<8x256xf32>
    %c0_1 = arith.constant 0 : index
    %c0_2 = arith.constant 0 : index
    %1 = vector.load %arg3[%c0_1, %c0_2] : memref<8x1xf32, #tpu.memory_space<vmem>>, vector<8x1xf32>
    %2 = vector.broadcast %1 : vector<8x1xf32> to vector<8x256xf32>
    %3 = arith.mulf %0, %2 : vector<8x256xf32>
    %c0_3 = arith.constant 0 : index
    %c0_4 = arith.constant 0 : index
    %4 = vector.load %arg4[%c0_3, %c0_4] : memref<8x256xf32, #tpu.memory_space<vmem>>, vector<8x256xf32>
    tpu.vector_store %arg4[%c0_3, %c0_4], %3 {strides = array<i32>} : memref<8x256xf32, #tpu.memory_space<vmem>>, vector<8x256xf32>,
    return
  }
  func.func @transform_0(%arg0: i32, %arg1: i32) -> (i32, i32) {
    %c0_i32 = arith.constant 0 : i32
    return %arg0, %arg1 : i32, i32
  }
  func.func @transform_1(%arg0: i32, %arg1: i32) -> (i32, i32) {
    %c0_i32 = arith.constant 0 : i32
    %c0_i32_0 = arith.constant 0 : i32
    return %arg0, %c0_i32 : i32, i32
  }
  func.func @transform_2(%arg0: i32, %arg1: i32) -> (i32, i32) {
    %c0_i32 = arith.constant 0 : i32
    return %arg0, %arg1 : i32, i32
  }
}

</mosaic_0001>

<llo_original>
// kernel: tpu_custom_call.1
$region0: #{tpu_custom_call.1}
  #allocation0 [shape = 'u32[]', space=smem, size = 0x4, offset = 0x4, fixed_abs, tag = 'smem constant byte address 0x4 - core index']
  #allocation1 [shape = 'u32[72,128]{1,0:T(1,128)}', space=vmem, size = 0x9000, scoped, tag = 'internal scratch']
  %s0 = inlined_call_operand.hbm [shape: f32[8,256], index: 0, kind: input, shape index: {}]
  %s1 = inlined_call_operand.vmem [shape: f32[8,1], index: 1, kind: input, shape index: {}]
  %s2 = inlined_call_operand.hbm [shape: f32[8,256], index: 2, kind: output, shape index: {}]
  %s3 = sld [smem:[#allocation0]]
  $region22: #{tpu_custom_call.1} parent=0
    _
  %s5 = ssub.s32 1, %s3
  %s6 = scalar_select 0, %s5, %s3
  $region1: #{tpu_custom_call.1} parent=0
    #allocation2 [shape = 'u8[8192]{0}', space=vmem, size = 0x2000, scoped, tag = 'input window, operand 0, single buffered']
    #allocation3 [shape = 's32[1]{0}', space=sflag, size = 0x4, scoped, tag = 'scoped memory for tpu_custom_call.1']
    #allocation4 [shape = 's32[1]{0}', space=sflag, size = 0x4, scoped, tag = 'scoped memory for tpu_custom_call.1']
    #allocation5 [shape = 'u8[8192]{0}', space=vmem, size = 0x2000, scoped, tag = 'output window, operand 0, single buffered']
    %7 = vsyncpa [#allocation3], 0
    %8 = vsyncpa [#allocation4], 0
    // Predicated region
    $region2: #{tpu_custom_call.1} parent=1 // pred_check
      _
    $region3: #{tpu_custom_call.1} parent=1 // pred_check_branch
      %10 = sbr.rel (0) target = $region5
    $region4: #{tpu_custom_call.1} parent=1 // pred_region
      %12 = vsyncadd [#allocation3], 0
      %s14 = sshll.u32 %s0, 4
      %s15 = int_to_ptr.hbm [resolvable:$true] %s14
      %s16 = sshll.u32 [#allocation2], 4
      %s17 = int_to_ptr.vmem [resolvable:$true] %s16
      %19 = dma.hbm_to_vmem [thread:$0]  %s15, 256, %s17, [#allocation3]
    $region5: #{tpu_custom_call.1} parent=1 // pred_fallthru
      _
    // Predicated region
    $region6: #{tpu_custom_call.1} parent=1 // pred_check
      _
    $region7: #{tpu_custom_call.1} parent=1 // pred_check_branch
      %21 = sbr.rel (0) target = $region9
    $region8: #{tpu_custom_call.1} parent=1 // pred_region
      _
    $region9: #{tpu_custom_call.1} parent=1 // pred_fallthru
      _
    // Predicated region
    $region10: #{tpu_custom_call.1} parent=1 // pred_check
      _
    $region11: #{tpu_custom_call.1} parent=1 // pred_check_branch
      %23 = sbr.rel (0) target = $region13
    $region12: #{tpu_custom_call.1} parent=1 // pred_region
      %25 = dma.done [#allocation3], 256
    $region13: #{tpu_custom_call.1} parent=1 // pred_fallthru
      _
    %v26 = vld [vmem:[#allocation2] sm:$0xff]
    %v27 = vld [vmem:[#allocation2 + $0x8] sm:$0xff]
    %v28 = vld [vmem:[%s1] sm:$0xff]
    %30 = vset.pattern.permute.xlu0 0
    %31 = vperm.xlu0 %30, %v28
    %v32 = vpop.permute.xlu0 %31
    %v34 = vmul.f32 %v26, %v32
    %v35 = vmul.f32 %v27, %v32
    %36 = vst [vmem:[#allocation5] sm:$0xff] %v34
    %37 = vst [vmem:[#allocation5 + $0x8] sm:$0xff] %v35
    // Predicated region
    $region14: #{tpu_custom_call.1} parent=1 // pred_check
      _
    $region15: #{tpu_custom_call.1} parent=1 // pred_check_branch
      %39 = sbr.rel (0) target = $region17
    $region16: #{tpu_custom_call.1} parent=1 // pred_region
      %41 = vsyncadd [#allocation4], 0
      %s43 = sshll.u32 [#allocation5], 4
      %s44 = int_to_ptr.vmem [resolvable:$true] %s43
      %s45 = sshll.u32 %s2, 4
      %s46 = int_to_ptr.hbm [resolvable:$true] %s45
      %48 = dma.vmem_to_hbm [thread:$0]  %s44, 256, %s46, [#allocation4]
    $region17: #{tpu_custom_call.1} parent=1 // pred_fallthru
      _
    // Predicated region
    $region18: #{tpu_custom_call.1} parent=1 // pred_check
      _
    $region19: #{tpu_custom_call.1} parent=1 // pred_check_branch
      %50 = sbr.rel (0) target = $region21
    $region20: #{tpu_custom_call.1} parent=1 // pred_region
      %52 = dma.done [#allocation4], 256
    $region21: #{tpu_custom_call.1} parent=1 // pred_fallthru
      _
    %53 = vsyncpa [#allocation3], 1
    %54 = vsyncpa [#allocation4], 1

</llo_original>
